<compile_context>
chip_gen: v5e
topology: v5e:2x2
jax: 0.10.0
libtpu: 0.0.40
codegen_flags: <defaults>
</compile_context>

<pallas_src>
import functools

import jax
import jax.numpy as jnp
from jax import lax
from jax.experimental import pallas as pl
from jax.experimental.pallas import tpu as pltpu


def _round_up(x, m):
    return ((x + m - 1) // m) * m


def _sincere_row_tile_kernel(e_rows_ref, e_all_ref, lab_col_ref, lab_row_ref,
                             inv_cnt_ref, out_ref, *, inv_temp, n_valid, tm):
    # e_rows_ref: (TM, D) bf16    row tile of embeddings
    # e_all_ref:  (Npad, D) bf16  all embeddings (resident across the grid)
    # lab_col_ref: (TM, 1) i32    labels of the row tile
    # lab_row_ref: (1, Npad) i32  labels of all columns (padded with -1)
    # inv_cnt_ref: (1, Npad) f32  1 / numer_count per column (0 for padded cols)
    # out_ref:    (TM, 1) f32     per-row partial loss  sum_j ce[i,j] * inv_cnt[j]

    # Gram tile on the MXU: bf16 operands, f32 accumulation, 'id,jd->ij'.
    logits = lax.dot_general(
        e_rows_ref[...], e_all_ref[...],
        dimension_numbers=(((1,), (1,)), ((), ())),
        preferred_element_type=jnp.float32,
    ) * jnp.float32(inv_temp)                                     # (TM, Npad) f32

    lab_col = lab_col_ref[...]                                    # (TM, 1)
    lab_row = lab_row_ref[...]                                    # (1, Npad)
    same = lab_col == lab_row                                     # (TM, Npad) bool

    npad = lab_row.shape[1]
    col_ids = lax.broadcasted_iota(jnp.int32, (1, npad), 1)       # (1, Npad)
    row_ids = (pl.program_id(0) * tm
               + lax.broadcasted_iota(jnp.int32, (tm, 1), 0))     # (TM, 1)
    col_valid = col_ids < n_valid                                 # (1, Npad)

    neg_inf = jnp.float32(-jnp.inf)

    # base_denom[i] = logsumexp over valid negatives j of logits[i, j].
    masked = jnp.where(jnp.logical_and(jnp.logical_not(same), col_valid),
                       logits, neg_inf)                           # (TM, Npad)
    m = jnp.max(masked, axis=1, keepdims=True)                    # (TM, 1)
    safe_m = jnp.where(m == neg_inf, jnp.float32(0.0), m)
    s = jnp.sum(jnp.exp(masked - safe_m), axis=1, keepdims=True)  # exp(-inf) = 0
    base_denom = jnp.where(s > 0, jnp.log(s) + safe_m, neg_inf)   # (TM, 1)

    # ce[i,j] = logaddexp(logits, base_denom) - logits = softplus(base_denom - logits)
    x = base_denom - logits                                       # (TM, Npad)
    ce = jnp.maximum(x, 0.0) + jnp.log(1.0 + jnp.exp(-jnp.abs(x)))

    in_numer = jnp.logical_and(same, row_ids != col_ids)          # positives, no diagonal
    contrib = jnp.where(in_numer, ce, jnp.float32(0.0)) * inv_cnt_ref[...]
    out_ref[...] = jnp.sum(contrib, axis=1, keepdims=True)        # (TM, 1)


def multiview_sincere_loss(embeds, labels, temperature=0.07, *, block_rows=128):
    """embeds: (B, V, D) float, normalized over D.  labels: (B,) int.  -> scalar loss."""
    b, v, d = embeds.shape
    n = b * v

    # Flatten views (view-major within sample) — matches torch.reshape +
    # labels.repeat_interleave(V).  bf16 operands for the MXU (f32 accumulation).
    e = embeds.reshape(n, d).astype(jnp.bfloat16)
    lab = jnp.repeat(labels.astype(jnp.int32), v)                 # (N,)

    # numer_count[j] = (#rows sharing label of j) - 1, computed O(B^2) here
    # instead of an N^2 reduction in the kernel.  Guarded reciprocal: a column
    # with zero positives (label seen once with V==1) contributes 0 instead of
    # NaN (only deviation from torch, which NaNs in that degenerate case).
    counts_b = jnp.sum(labels[None, :] == labels[:, None], axis=1)   # (B,)
    numer_count = jnp.repeat(counts_b * v, v) - 1                    # (N,)
    inv_cnt = jnp.where(numer_count > 0, 1.0 / numer_count, 0.0).astype(jnp.float32)

    # Row-tile size: multiple of 8, clamped to N.  Temporaries per tile are
    # ~6 x TM x Npad x 4B; TM=128 keeps that well inside the 48 MiB scoped VMEM
    # budget below even on v7x (64 MiB physical) for typical contrastive batches.
    tm = _round_up(min(block_rows, n), 8)
    n_pad = _round_up(n, tm)
    pad = n_pad - n

    e_p = jnp.pad(e, ((0, pad), (0, 0)))
    lab_p = jnp.pad(lab, (0, pad), constant_values=-1)
    inv_p = jnp.pad(inv_cnt, (0, pad))

    lab_col = lab_p.reshape(n_pad, 1)
    lab_row = lab_p.reshape(1, n_pad)
    inv_row = inv_p.reshape(1, n_pad)

    kernel = functools.partial(_sincere_row_tile_kernel,
                               inv_temp=1.0 / temperature, n_valid=n, tm=tm)
    per_row = pl.pallas_call(
        kernel,
        grid=(n_pad // tm,),
        in_specs=[
            pl.BlockSpec((tm, d), lambda i: (i, 0)),       # row tile of embeddings
            pl.BlockSpec((n_pad, d), lambda i: (0, 0)),    # all embeddings (resident)
            pl.BlockSpec((tm, 1), lambda i: (i, 0)),       # row-tile labels
            pl.BlockSpec((1, n_pad), lambda i: (0, 0)),    # all labels (resident)
            pl.BlockSpec((1, n_pad), lambda i: (0, 0)),    # 1/numer_count (resident)
        ],
        out_specs=pl.BlockSpec((tm, 1), lambda i: (i, 0)),
        out_shape=jax.ShapeDtypeStruct((n_pad, 1), jnp.float32),
        compiler_params=pltpu.CompilerParams(
            dimension_semantics=("parallel",),             # row tiles independent (2 TCs on v7x)
            vmem_limit_bytes=48 * 1024 * 1024,
        ),
    )(e_p, e_p, lab_col, lab_row, inv_row)

    return jnp.sum(per_row[:n, 0]) / jnp.float32(n)


def _reference_loss(embeds, labels, temperature=0.07, matmul_dtype=jnp.float32):
    """Pure-JAX reference mirroring the PyTorch code.  matmul_dtype=bf16 mimics
    the MXU operand rounding used by the kernel."""
    b, v, d = embeds.shape
    n = b * v
    e = embeds.reshape(n, d).astype(matmul_dtype).astype(jnp.float32)
    lab = jnp.repeat(labels.astype(jnp.int32), v)
    logits = jnp.einsum("id,jd->ij", e, e,
                        precision=lax.Precision.HIGHEST) / temperature
    same = lab[None, :] == lab[:, None]
    denom_act = jnp.where(~same, logits, -jnp.inf)
    base_denom = jax.nn.logsumexp(denom_act, axis=0)[:, None]     # (N, 1)
    in_numer = same & ~jnp.eye(n, dtype=bool)
    numer_count = jnp.sum(in_numer, axis=0)                       # (N,)
    log_denom = jnp.logaddexp(logits, base_denom)
    ce = jnp.where(in_numer, log_denom - logits, 0.0)
    return jnp.sum(ce / numer_count[None, :]) / n


if __name__ == "__main__":
    key = jax.random.PRNGKey(0)
    B, V, D = 20, 2, 32                     # N = 40 -> 3 row tiles of 16 with padding
    labels = jnp.arange(B, dtype=jnp.int32) % 5   # each label: 4 samples x 2 views
    embeds = jax.random.normal(key, (B, V, D), dtype=jnp.float32)
    embeds = embeds / jnp.linalg.norm(embeds, axis=-1, keepdims=True)

    loss = multiview_sincere_loss(embeds, labels, temperature=0.07, block_rows=16)
    loss = jax.block_until_ready(loss)

    ref_mxu = jax.block_until_ready(
        _reference_loss(embeds, labels, 0.07, matmul_dtype=jnp.bfloat16))
    ref_f32 = jax.block_until_ready(
        _reference_loss(embeds, labels, 0.07, matmul_dtype=jnp.float32))

    assert jnp.isfinite(loss), "loss is not finite"
    assert jnp.allclose(loss, ref_mxu, rtol=1e-3, atol=1e-3), (loss, ref_mxu)
    assert jnp.allclose(loss, ref_f32, rtol=5e-2, atol=5e-2), (loss, ref_f32)

    print("KERNEL_OK")
</pallas_src>

<mosaic_0001>
module attributes {stable_mosaic.version = 11 : i64} {
  func.func @_sincere_row_tile_kernel(%arg0: i32, %arg1: memref<16x32xbf16, #tpu.memory_space<vmem>>, %arg2: memref<48x32xbf16, #tpu.memory_space<vmem>>, %arg3: memref<16x1xi32, #tpu.memory_space<vmem>>, %arg4: memref<1x48xi32, #tpu.memory_space<vmem>>, %arg5: memref<1x48xf32, #tpu.memory_space<vmem>>, %arg6: memref<16x1xf32, #tpu.memory_space<vmem>>) attributes {dimension_semantics = [#tpu.dimension_semantics<parallel>], iteration_bounds = array<i64: 3>, scalar_prefetch = 0 : i64, scratch_operands = 0 : i64, tpu.core_type = #tpu.core_type<tc>, window_params = [{transform_indices = @transform_0, window_bounds = array<i64: 16, 32>}, {pipeline_mode = #tpu.pipeline_mode<synchronous>, transform_indices = @transform_1, window_bounds = array<i64: 48, 32>}, {transform_indices = @transform_2, window_bounds = array<i64: 16, 1>}, {pipeline_mode = #tpu.pipeline_mode<synchronous>, transform_indices = @transform_3, window_bounds = array<i64: 1, 48>}, {pipeline_mode = #tpu.pipeline_mode<synchronous>, transform_indices = @transform_4, window_bounds = array<i64: 1, 48>}, {transform_indices = @transform_5, window_bounds = array<i64: 16, 1>}]} {
    %c0 = arith.constant 0 : index
    %c0_0 = arith.constant 0 : index
    %0 = vector.load %arg1[%c0, %c0_0] : memref<16x32xbf16, #tpu.memory_space<vmem>>, vector<16x32xbf16>
    %c0_1 = arith.constant 0 : index
    %c0_2 = arith.constant 0 : index
    %1 = vector.load %arg2[%c0_1, %c0_2] : memref<48x32xbf16, #tpu.memory_space<vmem>>, vector<48x32xbf16>
    %cst = arith.constant dense<0.000000e+00> : vector<16x48xf32>
    %2 = tpu.matmul %0, %1, %cst {dimension_numbers = #tpu.dot_dimension_numbers<[1], [1], [0], [0], [0, 0, 1, 0], [], []>} : vector<16x32xbf16>, vector<48x32xbf16>, vector<16x48xf32> -> vector<16x48xf32>
    %cst_3 = arith.constant 14.2857141 : f32
    %3 = vector.broadcast %cst_3 : f32 to vector<16x48xf32>
    %4 = arith.mulf %2, %3 : vector<16x48xf32>
    %c0_4 = arith.constant 0 : index
    %c0_5 = arith.constant 0 : index
    %5 = vector.load %arg3[%c0_4, %c0_5] : memref<16x1xi32, #tpu.memory_space<vmem>>, vector<16x1xi32>
    %c0_6 = arith.constant 0 : index
    %c0_7 = arith.constant 0 : index
    %6 = vector.load %arg4[%c0_6, %c0_7] : memref<1x48xi32, #tpu.memory_space<vmem>>, vector<1x48xi32>
    %7 = vector.broadcast %5 : vector<16x1xi32> to vector<16x48xi32>
    %8 = vector.broadcast %6 : vector<1x48xi32> to vector<16x48xi32>
    %9 = arith.cmpi eq, %7, %8 : vector<16x48xi32>
    %10 = tpu.iota {dimensions = array<i32: 1>} : vector<1x48xi32>
    %c16_i32 = arith.constant 16 : i32
    %11 = arith.muli %arg0, %c16_i32 : i32
    %12 = tpu.iota {dimensions = array<i32: 0>} : vector<16x1xi32>
    %13 = vector.broadcast %11 : i32 to vector<16x1xi32>
    %14 = arith.addi %13, %12 : vector<16x1xi32>
    %c40_i32 = arith.constant 40 : i32
    %15 = vector.broadcast %c40_i32 : i32 to vector<1x48xi32>
    %16 = arith.cmpi slt, %10, %15 : vector<1x48xi32>
    %cst_8 = arith.constant dense<true> : vector<16x48xi1>
    %17 = arith.xori %9, %cst_8 : vector<16x48xi1>
    %18 = vector.broadcast %16 : vector<1x48xi1> to vector<16x48xi1>
    %19 = arith.andi %17, %18 : vector<16x48xi1>
    %cst_9 = arith.constant 0xFF800000 : f32
    %20 = vector.broadcast %cst_9 : f32 to vector<16x48xf32>
    %21 = arith.select %19, %4, %20 : vector<16x48xi1>, vector<16x48xf32>
    %cst_10 = arith.constant dense<0xFF800000> : vector<16xf32>
    %22 = vector.multi_reduction <maximumf>, %21, %cst_10 [1] : vector<16x48xf32> to vector<16xf32>
    %23 = vector.shape_cast %22 : vector<16xf32> to vector<16x1xf32>
    %cst_11 = arith.constant 0xFF800000 : f32
    %24 = vector.broadcast %cst_11 : f32 to vector<16x1xf32>
    %25 = arith.cmpf oeq, %23, %24 : vector<16x1xf32>
    %cst_12 = arith.constant 0.000000e+00 : f32
    %26 = vector.broadcast %cst_12 : f32 to vector<16x1xf32>
    %27 = arith.select %25, %26, %23 : vector<16x1xi1>, vector<16x1xf32>
    %28 = vector.broadcast %27 : vector<16x1xf32> to vector<16x48xf32>
    %29 = arith.subf %21, %28 : vector<16x48xf32>
    %30 = math.exp %29 : vector<16x48xf32>
    %cst_13 = arith.constant dense<0.000000e+00> : vector<16xf32>
    %31 = vector.multi_reduction <add>, %30, %cst_13 [1] : vector<16x48xf32> to vector<16xf32>
    %32 = vector.shape_cast %31 : vector<16xf32> to vector<16x1xf32>
    %cst_14 = arith.constant 0.000000e+00 : f32
    %33 = vector.broadcast %cst_14 : f32 to vector<16x1xf32>
    %34 = arith.cmpf ogt, %32, %33 : vector<16x1xf32>
    %35 = math.log %32 : vector<16x1xf32>
    %36 = arith.addf %35, %27 : vector<16x1xf32>
    %cst_15 = arith.constant 0xFF800000 : f32
    %37 = vector.broadcast %cst_15 : f32 to vector<16x1xf32>
    %38 = arith.select %34, %36, %37 : vector<16x1xi1>, vector<16x1xf32>
    %39 = vector.broadcast %38 : vector<16x1xf32> to vector<16x48xf32>
    %40 = arith.subf %39, %4 : vector<16x48xf32>
    %cst_16 = arith.constant 0.000000e+00 : f32
    %41 = vector.broadcast %cst_16 : f32 to vector<16x48xf32>
    %42 = arith.maximumf %40, %41 : vector<16x48xf32>
    %43 = math.absf %40 : vector<16x48xf32>
    %cst_17 = arith.constant 0.000000e+00 : f32
    %44 = vector.broadcast %cst_17 : f32 to vector<16x48xf32>
    %45 = arith.subf %44, %43 : vector<16x48xf32>
    %46 = math.exp %45 : vector<16x48xf32>
    %cst_18 = arith.constant 1.000000e+00 : f32
    %47 = vector.broadcast %cst_18 : f32 to vector<16x48xf32>
    %48 = arith.addf %47, %46 : vector<16x48xf32>
    %49 = math.log %48 : vector<16x48xf32>
    %50 = arith.addf %42, %49 : vector<16x48xf32>
    %51 = vector.broadcast %14 : vector<16x1xi32> to vector<16x48xi32>
    %52 = vector.broadcast %10 : vector<1x48xi32> to vector<16x48xi32>
    %53 = arith.cmpi ne, %51, %52 : vector<16x48xi32>
    %54 = arith.andi %9, %53 : vector<16x48xi1>
    %cst_19 = arith.constant 0.000000e+00 : f32
    %55 = vector.broadcast %cst_19 : f32 to vector<16x48xf32>
    %56 = arith.select %54, %50, %55 : vector<16x48xi1>, vector<16x48xf32>
    %c0_20 = arith.constant 0 : index
    %c0_21 = arith.constant 0 : index
    %57 = vector.load %arg5[%c0_20, %c0_21] : memref<1x48xf32, #tpu.memory_space<vmem>>, vector<1x48xf32>
    %58 = vector.broadcast %57 : vector<1x48xf32> to vector<16x48xf32>
    %59 = arith.mulf %56, %58 : vector<16x48xf32>
    %cst_22 = arith.constant dense<0.000000e+00> : vector<16xf32>
    %60 = vector.multi_reduction <add>, %59, %cst_22 [1] : vector<16x48xf32> to vector<16xf32>
    %61 = vector.shape_cast %60 : vector<16xf32> to vector<16x1xf32>
    %c0_23 = arith.constant 0 : index
    %c0_24 = arith.constant 0 : index
    %62 = vector.load %arg6[%c0_23, %c0_24] : memref<16x1xf32, #tpu.memory_space<vmem>>, vector<16x1xf32>
    tpu.vector_store %arg6[%c0_23, %c0_24], %61 {strides = array<i32>} : memref<16x1xf32, #tpu.memory_space<vmem>>, vector<16x1xf32>,
    return
  }
  func.func @transform_0(%arg0: i32) -> (i32, i32) {
    %c0_i32 = arith.constant 0 : i32
    %c0_i32_0 = arith.constant 0 : i32
    return %arg0, %c0_i32 : i32, i32
  }
  func.func @transform_1(%arg0: i32) -> (i32, i32) {
    %c0_i32 = arith.constant 0 : i32
    %c0_i32_0 = arith.constant 0 : i32
    %c0_i32_1 = arith.constant 0 : i32
    return %c0_i32, %c0_i32_0 : i32, i32
  }
  func.func @transform_2(%arg0: i32) -> (i32, i32) {
    %c0_i32 = arith.constant 0 : i32
    %c0_i32_0 = arith.constant 0 : i32
    return %arg0, %c0_i32 : i32, i32
  }
  func.func @transform_3(%arg0: i32) -> (i32, i32) {
    %c0_i32 = arith.constant 0 : i32
    %c0_i32_0 = arith.constant 0 : i32
    %c0_i32_1 = arith.constant 0 : i32
    return %c0_i32, %c0_i32_0 : i32, i32
  }
  func.func @transform_4(%arg0: i32) -> (i32, i32) {
    %c0_i32 = arith.constant 0 : i32
    %c0_i32_0 = arith.constant 0 : i32
    %c0_i32_1 = arith.constant 0 : i32
    return %c0_i32, %c0_i32_0 : i32, i32
  }
  func.func @transform_5(%arg0: i32) -> (i32, i32) {
    %c0_i32 = arith.constant 0 : i32
    %c0_i32_0 = arith.constant 0 : i32
    return %arg0, %c0_i32 : i32, i32
  }
}

</mosaic_0001>

<llo_original>
// kernel: tpu_custom_call.1
$region0: #{tpu_custom_call.1}
  #allocation0 [shape = 'u32[]', space=smem, size = 0x4, offset = 0x4, fixed_abs, tag = 'smem constant byte address 0x4 - core index']
  #allocation1 [shape = 'u32[72,128]{1,0:T(1,128)}', space=vmem, size = 0x9000, scoped, tag = 'internal scratch']
  %s0 = inlined_call_operand.vmem [shape: bf16[48,32], index: 0, kind: input, shape index: {}]
  %s1 = inlined_call_operand.vmem [shape: bf16[48,32], index: 1, kind: input, shape index: {}]
  %s2 = inlined_call_operand.vmem [shape: s32[48,1], index: 2, kind: input, shape index: {}]
  %s3 = inlined_call_operand.vmem [shape: s32[1,48], index: 3, kind: input, shape index: {}]
  %s4 = inlined_call_operand.vmem [shape: f32[1,48], index: 4, kind: input, shape index: {}]
  %s5 = inlined_call_operand.vmem [shape: f32[48,1], index: 5, kind: output, shape index: {}]
  %s6 = sld [smem:[#allocation0]]
  $region53: #{tpu_custom_call.1} parent=0
    _
  %s8 = ssub.s32 1, %s6
  %s9 = scalar_select 0, %s8, %s6
  loop: start=0, step=1, limit=5
  $region2: #{tpu_custom_call.1} parent=0 // loop_pre_header
    _
  $region3: #{tpu_custom_call.1} parent=0 // loop_header
    %s11 = sphi 0, %s15
    %p12 = scmp.ge.s32.totalorder %s11, 5
    %s21 = sphi 0, %s23
    %s24 = sphi 0, %s21
    %s25 = sphi 0, %s24
    %s41 = sphi 0, %s25
    %s45 = sphi 0, %s45
    %s47 = sphi 0, %s45
    %s48 = sphi 0, %s47
    %s62 = sphi 0, %s48
    %s68 = sphi 0, %s70
    %s71 = sphi 0, %s68
    %s72 = sphi 0, %s71
    %s88 = sphi 0, %s72
    %s92 = sphi 0, %s92
    %s94 = sphi 0, %s92
    %s95 = sphi 0, %s94
    %s109 = sphi 0, %s95
    %s113 = sphi 0, %s113
    %s115 = sphi 0, %s113
    %s116 = sphi 0, %s115
    %s130 = sphi 0, %s116
    %s136 = sphi 0, %s138
    %s139 = sphi 0, %s136
    %s140 = sphi 0, %s139
    %s156 = sphi 0, %s140
  $region4: #{tpu_custom_call.1} parent=0 // loop_header_branch
    %14 = sbr.rel (%p12) target = $region8
  $region5: #{tpu_custom_call.1} parent=0 // loop_body
    %s16 = ssub.s32 %s11, 1
    %s17 = ssub.s32 %s11, 2
    %s18 = sadd.s32 %s11, 1
    %s19 = ssub.s32 %s11, %s18
    %p20 = scmp.eq.s32.totalorder %s19, 0
    %s22 = sadd.s32 %s21, 1
    %s23 = scalar_select %p20, %s21, %s22
    %p26 = pneg %p20
    %p27 = scmp.eq.s32.totalorder %s11, 2
    %p28 = por %p26, %p27
    %p29 = scmp.ne.s32.totalorder %s21, %s24
    %p30 = scmp.eq.s32.totalorder %s11, 0
    %p31 = por %p29, %p30
    %p32 = scmp.ne.s32.totalorder %s21, %s24
    %p33 = scmp.eq.s32.totalorder %s16, 2
    %p34 = por %p32, %p33
    %p35 = scmp.ne.s32.totalorder %s24, %s25
    %p36 = scmp.eq.s32.totalorder %s16, 0
    %p37 = por %p35, %p36
    %p38 = scmp.ne.s32.totalorder %s24, %s25
    %p39 = scmp.eq.s32.totalorder %s17, 2
    %p40 = por %p38, %p39
    %p42 = scmp.ne.s32.totalorder %s25, %s41
    %p43 = scmp.eq.s32.totalorder %s17, 0
    %p44 = por %p42, %p43
    %s46 = sadd.s32 %s45, 1
    %p49 = scmp.eq.s32.totalorder %s11, 2
    %p50 = scmp.ne.s32.totalorder %s45, %s47
    %p51 = scmp.eq.s32.totalorder %s11, 0
    %p52 = por %p50, %p51
    %p53 = scmp.ne.s32.totalorder %s45, %s47
    %p54 = scmp.eq.s32.totalorder %s16, 2
    %p55 = por %p53, %p54
    %p56 = scmp.ne.s32.totalorder %s47, %s48
    %p57 = scmp.eq.s32.totalorder %s16, 0
    %p58 = por %p56, %p57
    %p59 = scmp.ne.s32.totalorder %s47, %s48
    %p60 = scmp.eq.s32.totalorder %s17, 2
    %p61 = por %p59, %p60
    %p63 = scmp.ne.s32.totalorder %s48, %s62
    %p64 = scmp.eq.s32.totalorder %s17, 0
    %p65 = por %p63, %p64
    %s66 = ssub.s32 %s11, %s18
    %p67 = scmp.eq.s32.totalorder %s66, 0
    %s69 = sadd.s32 %s68, 1
    %s70 = scalar_select %p67, %s68, %s69
    %p73 = pneg %p67
    %p74 = scmp.eq.s32.totalorder %s11, 2
    %p75 = por %p73, %p74
    %p76 = scmp.ne.s32.totalorder %s68, %s71
    %p77 = scmp.eq.s32.totalorder %s11, 0
    %p78 = por %p76, %p77
    %p79 = scmp.ne.s32.totalorder %s68, %s71
    %p80 = scmp.eq.s32.totalorder %s16, 2
    %p81 = por %p79, %p80
    %p82 = scmp.ne.s32.totalorder %s71, %s72
    %p83 = scmp.eq.s32.totalorder %s16, 0
    %p84 = por %p82, %p83
    %p85 = scmp.ne.s32.totalorder %s71, %s72
    %p86 = scmp.eq.s32.totalorder %s17, 2
    %p87 = por %p85, %p86
    %p89 = scmp.ne.s32.totalorder %s72, %s88
    %p90 = scmp.eq.s32.totalorder %s17, 0
    %p91 = por %p89, %p90
    %s93 = sadd.s32 %s92, 1
    %p96 = scmp.eq.s32.totalorder %s11, 2
    %p97 = scmp.ne.s32.totalorder %s92, %s94
    %p98 = scmp.eq.s32.totalorder %s11, 0
    %p99 = por %p97, %p98
    %p100 = scmp.ne.s32.totalorder %s92, %s94
    %p101 = scmp.eq.s32.totalorder %s16, 2
    %p102 = por %p100, %p101
    %p103 = scmp.ne.s32.totalorder %s94, %s95
    %p104 = scmp.eq.s32.totalorder %s16, 0
    %p105 = por %p103, %p104
    %p106 = scmp.ne.s32.totalorder %s94, %s95
    %p107 = scmp.eq.s32.totalorder %s17, 2
    %p108 = por %p106, %p107
    %p110 = scmp.ne.s32.totalorder %s95, %s109
    %p111 = scmp.eq.s32.totalorder %s17, 0
    %p112 = por %p110, %p111
    %s114 = sadd.s32 %s113, 1
    %p117 = scmp.eq.s32.totalorder %s11, 2
    %p118 = scmp.ne.s32.totalorder %s113, %s115
    %p119 = scmp.eq.s32.totalorder %s11, 0
    %p120 = por %p118, %p119
    %p121 = scmp.ne.s32.totalorder %s113, %s115
    %p122 = scmp.eq.s32.totalorder %s16, 2
    %p123 = por %p121, %p122
    %p124 = scmp.ne.s32.totalorder %s115, %s116
    %p125 = scmp.eq.s32.totalorder %s16, 0
    %p126 = por %p124, %p125
    %p127 = scmp.ne.s32.totalorder %s115, %s116
    %p128 = scmp.eq.s32.totalorder %s17, 2
    %p129 = por %p127, %p128
    %p131 = scmp.ne.s32.totalorder %s116, %s130
    %p132 = scmp.eq.s32.totalorder %s17, 0
    %p133 = por %p131, %p132
    %s134 = ssub.s32 %s11, %s18
    %p135 = scmp.eq.s32.totalorder %s134, 0
    %s137 = sadd.s32 %s136, 1
    %s138 = scalar_select %p135, %s136, %s137
    %p141 = pneg %p135
    %p142 = scmp.eq.s32.totalorder %s11, 2
    %p143 = por %p141, %p142
    %p144 = scmp.ne.s32.totalorder %s136, %s139
    %p145 = scmp.eq.s32.totalorder %s11, 0
    %p146 = por %p144, %p145
    %p147 = scmp.ne.s32.totalorder %s136, %s139
    %p148 = scmp.eq.s32.totalorder %s16, 2
    %p149 = por %p147, %p148
    %p150 = scmp.ne.s32.totalorder %s139, %s140
    %p151 = scmp.eq.s32.totalorder %s16, 0
    %p152 = por %p150, %p151
    %p153 = scmp.ne.s32.totalorder %s139, %s140
    %p154 = scmp.eq.s32.totalorder %s17, 2
    %p155 = por %p153, %p154
    %p157 = scmp.ne.s32.totalorder %s140, %s156
    %p158 = scmp.eq.s32.totalorder %s17, 0
    %p159 = por %p157, %p158
    %p160 = scmp.le.s32.totalorder 1, %s11
    %p161 = scmp.lt.s32.totalorder %s11, 4
    %p162 = pnand %p160, %p161
    %p163 = pneg %p162
    // Predicated region
    $region9: #{tpu_custom_call.1} parent=5 // pred_check
      _
    $region10: #{tpu_custom_call.1} parent=5 // pred_check_branch
      %165 = sbr.rel (%p162) target = $region12
    $region11: #{tpu_custom_call.1} parent=5 // pred_region
      %s166 = ssub.s32 %s11, 1
      // Predicated region
      $region13: #{tpu_custom_call.1} parent=11 // pred_check
        %p167 = pneg %p58
      $region14: #{tpu_custom_call.1} parent=11 // pred_check_branch
        %169 = sbr.rel (%p167) target = $region16
      $region15: #{tpu_custom_call.1} parent=11 // pred_region
        _
      $region16: #{tpu_custom_call.1} parent=11 // pred_fallthru
        _
      // Predicated region
      $region17: #{tpu_custom_call.1} parent=11 // pred_check
        %p170 = pneg %p105
      $region18: #{tpu_custom_call.1} parent=11 // pred_check_branch
        %172 = sbr.rel (%p170) target = $region20
      $region19: #{tpu_custom_call.1} parent=11 // pred_region
        _
      $region20: #{tpu_custom_call.1} parent=11 // pred_fallthru
        _
      // Predicated region
      $region21: #{tpu_custom_call.1} parent=11 // pred_check
        %p173 = pneg %p126
      $region22: #{tpu_custom_call.1} parent=11 // pred_check_branch
        %175 = sbr.rel (%p173) target = $region24
      $region23: #{tpu_custom_call.1} parent=11 // pred_region
        _
      $region24: #{tpu_custom_call.1} parent=11 // pred_fallthru
        _
    $region12: #{tpu_custom_call.1} parent=5 // pred_fallthru
      _
    %p176 = scmp.lt.s32.totalorder %s11, 3
    // Predicated region
    $region25: #{tpu_custom_call.1} parent=5 // pred_check
      %p177 = pneg %p176
    $region26: #{tpu_custom_call.1} parent=5 // pred_check_branch
      %179 = sbr.rel (%p177) target = $region28
    $region27: #{tpu_custom_call.1} parent=5 // pred_region
      // Predicated region
      $region29: #{tpu_custom_call.1} parent=27 // pred_check
        %p180 = pneg %p31
      $region30: #{tpu_custom_call.1} parent=27 // pred_check_branch
        %182 = sbr.rel (%p180) target = $region32
      $region31: #{tpu_custom_call.1} parent=27 // pred_region
        %s183 = smul.u32 2, %s11
        %p184 = scmp.lt.s32.totalorder %s183, 5
        %s185 = scalar_select %p184, %s183, 5
        %s186 = smul.addr %s185, 4
        %s187 = scalar_lea.vmem %s0, %s186
        %s188 = smul.u32 2, %s11
      $region32: #{tpu_custom_call.1} parent=27 // pred_fallthru
        _
      // Predicated region
      $region33: #{tpu_custom_call.1} parent=27 // pred_check
        %p189 = pneg %p78
      $region34: #{tpu_custom_call.1} parent=27 // pred_check_branch
        %191 = sbr.rel (%p189) target = $region36
      $region35: #{tpu_custom_call.1} parent=27 // pred_region
        %s192 = smul.u32 2, %s11
        %p193 = scmp.lt.s32.totalorder %s192, 5
        %s194 = scalar_select %p193, %s192, 5
        %s195 = smul.addr %s194, 8
        %s196 = scalar_lea.vmem %s2, %s195
        %s197 = smul.u32 2, %s11
      $region36: #{tpu_custom_call.1} parent=27 // pred_fallthru
        _
    $region28: #{tpu_custom_call.1} parent=5 // pred_fallthru
      _
    %p198 = scmp.le.s32.totalorder 1, %s11
    %p199 = scmp.lt.s32.totalorder %s11, 4
    %p200 = pnand %p198, %p199
    %p201 = pneg %p200
    // Predicated region
    $region37: #{tpu_custom_call.1} parent=5 // pred_check
      _
    $region38: #{tpu_custom_call.1} parent=5 // pred_check_branch
      %203 = sbr.rel (%p200) target = $region40
    $region39: #{tpu_custom_call.1} parent=5 // pred_region
      %s204 = ssub.s32 %s11, 1
      %s205 = smul.u32 2, %s16
      %p206 = scmp.lt.s32.totalorder %s205, 5
      %s207 = scalar_select %p206, %s205, 5
      %s208 = smul.addr %s207, 4
      %s209 = scalar_lea.vmem %s0, %s208
      %p210 = pneg %p37
      %p211 = pneg %p34
      %p212 = pneg %p58
      %p213 = pneg %p55
      %s214 = smul.u32 2, %s16
      %p215 = scmp.lt.s32.totalorder %s214, 5
      %s216 = scalar_select %p215, %s214, 5
      %s217 = smul.addr %s216, 8
      %s218 = scalar_lea.vmem %s2, %s217
      %p219 = pneg %p84
      %p220 = pneg %p81
      %p221 = pneg %p105
      %p222 = pneg %p102
      %p223 = pneg %p126
      %p224 = pneg %p123
      %p225 = pneg %p152
      %p226 = pneg %p149
      %s227 = smul.u32 2, %s16
      %p228 = scmp.lt.s32.totalorder %s227, 5
      %s229 = scalar_select %p228, %s227, 5
      %s230 = smul.addr %s229, 8
      %s231 = scalar_lea.vmem %s5, %s230
      %s232 = smul.u32 2, %s16
      %p233 = scmp.lt.s32.totalorder %s232, 5
      %s234 = scalar_select %p233, %s232, 5
      %s235 = smul.addr %s234, 4
      %s236 = scalar_lea.vmem %s0, %s235
      %s237 = smul.u32 2, %s16
      %s238 = smul.u32 2, %s16
      %p239 = scmp.lt.s32.totalorder %s238, 5
      %s240 = scalar_select %p239, %s238, 5
      %s241 = smul.addr %s240, 8
      %s242 = scalar_lea.vmem %s2, %s241
      %s243 = smul.u32 2, %s16
      %s244 = smul.u32 2, %s16
      %p245 = scmp.lt.s32.totalorder %s244, 5
      %s246 = scalar_select %p245, %s244, 5
      %s247 = smul.addr %s246, 8
      %s248 = scalar_lea.vmem %s5, %s247
      %s249 = smul.u32 2, %s16
      %v251 = vld [vmem:[%s236] sm:$0xf]
      %v252 = vld [vmem:[%s236 + $0x4] sm:$0xf]
      %v253 = vld [vmem:[%s1] sm:$0xf]
      %v254 = vld [vmem:[%s1 + $0x4] sm:$0xf]
      %v255 = vld [vmem:[%s1 + $0x8] sm:$0xf]
      %v256 = vld [vmem:[%s1 + $0xc] sm:$0xf]
      %v257 = vld [vmem:[%s1 + $0x10] sm:$0xf]
      %v258 = vld [vmem:[%s1 + $0x14] sm:$0xf]
      %v261 = vunpack.c.l.b16 %v251
      %v262 = vunpack.c.l.b16 %v252
      %v263 = vpack.c.b16 %v262, %v261
      %v270 = vunpack.c.l.b16 %v253
      %v271 = vunpack.c.l.b16 %v254
      %v272 = vunpack.c.l.b16 %v255
      %v273 = vunpack.c.l.b16 %v256
      %v274 = vunpack.c.l.b16 %v257
      %v275 = vunpack.c.l.b16 %v258
      %v276 = vpack.c.b16 %v271, %v270
      %v277 = vpack.c.b16 %v273, %v272
      %v278 = vpack.c.b16 %v275, %v274
      %vm279 = vcmask 261120
      %v281 = vsel %vm279, %v263, 0
      %v284 = vsel %vm279, %v276, 0
      %v287 = vsel %vm279, %v277, 0
      %v290 = vsel %vm279, %v278, 0
      %292 = vmatpush.bf16.xpose.msra.mxu0 0
      %293 = vmatpush.bf16.xpose.msra.mxu0 0
      %294 = vmatpush.bf16.xpose.msra.mxu0 0
      %295 = vmatpush.bf16.xpose.msra.mxu0 0
      %296 = vmatpush.bf16.xpose.msra.mxu0 0
      %297 = vmatpush.bf16.xpose.msra.mxu0 %v290
      %298 = vmatpush.bf16.xpose.msra.mxu0 %v287
      %299 = vmatpush.bf16.xpose.msra.mxu0 %v284
      %300 = vmatmul.bf16.gmra.mxu0 %v281
      %v301 = vpop.f32.mrf.mxu0
      %v302 = vadd.f32 0.0, %v301
      %v303 = vpop.f32.mrf.mxu0
      %v304 = vadd.f32 0.0, %v303
      %305 = vdwg.mxu0
      %v306 = vmul.f32 %v302, 14.285714
      %v307 = vmul.f32 %v304, 14.285714
      %v308 = vld [vmem:[%s242] sm:$0xff]
      %v309 = vld [vmem:[%s242 + $0x8] sm:$0xff]
      %v310 = vld [vmem:[%s3] sm:$0x1]
      %311 = vset.pattern.permute.xlu0 0
      %312 = vperm.xlu0 %311, %v308
      %v313 = vpop.permute.xlu0 %312
      %314 = vset.pattern.permute.xlu0 0
      %315 = vperm.xlu0 %314, %v309
      %v316 = vpop.permute.xlu0 %315
      %v317 = vperm.slane %v310, 0
      %vm318 = vcmp.eq.s32.totalorder %v313, %v317
      %vm319 = vcmp.eq.s32.totalorder %v316, %v317
      %v320 = vlaneseq
      %v321 = vand.u32 %v320, 127
      %s322 = smul.u32 %s16, 16
      %v323 = vlaneseq
      %v324 = vshrl.u32 %v323, 7
      %v325 = vadd.s32 %v324, 8
      %v326 = vstv %s322
      %v327 = vadd.s32 %v326, %v324
      %v328 = vadd.s32 %v326, %v325
      %vm329 = vcmp.lt.s32.totalorder %v321, 40
      %vm330 = vmxor %vm318, 1
      %vm331 = vmxor %vm319, 1
      %v332 = vsel %vm329, 1, 0
      %vm333 = vcmp.eq.s32.totalorder %v332, 1
      %vm334 = vmand %vm330, %vm333
      %vm335 = vmand %vm331, %vm333
      %v336 = vsel %vm334, %v306, -inf
      %v337 = vsel %vm335, %v307, -inf
      %vm338 = vcmask 392192
      %v339 = vsel %vm338, %v336, -inf
      %340 = vmax.xlane.f32.xlu0 %v339
      %v341 = vpop.xlane.xlu0 %340
      %v342 = vsel %vm338, %v337, -inf
      %343 = vmax.xlane.f32.xlu0 %v342
      %v344 = vpop.xlane.xlu0 %343
      %vm345 = vcmp.eq.f32.partialorder %v341, -inf
      %vm346 = vcmp.eq.f32.partialorder %v344, -inf
      %v347 = vsel %vm345, 0.0, %v341
      %v348 = vsel %vm346, 0.0, %v344
      %v349 = vsub.f32 %v336, %v347
      %v350 = vsub.f32 %v337, %v348
      %v351 = vmul.f32 %v349, 1.442695
      %v352 = vpow.pop %v351
      %v353 = vmul.f32 %v350, 1.442695
      %v354 = vpow.pop %v353
      %v355 = vsel %vm338, %v352, 0.0
      %356 = vadd.xlane.f32.xlu0 %v355
      %v357 = vpop.xlane.xlu0 %356
      %v358 = vsel %vm338, %v354, 0.0
      %359 = vadd.xlane.f32.xlu0 %v358
      %v360 = vpop.xlane.xlu0 %359
      %vm361 = vcmp.gt.f32.partialorder %v357, 0.0
      %vm362 = vcmp.gt.f32.partialorder %v360, 0.0
      %v363 = vlog2.pop %v357
      %v364 = vmul.f32 %v363, 0.6931472
      %v365 = vlog2.pop %v360
      %v366 = vmul.f32 %v365, 0.6931472
      %v367 = vadd.f32 %v364, %v347
      %v368 = vadd.f32 %v366, %v348
      %v369 = vsel %vm361, %v367, -inf
      %v370 = vsel %vm362, %v368, -inf
      %v371 = vsub.f32 %v369, %v306
      %v372 = vsub.f32 %v370, %v307
      %v373 = vmax.f32 %v371, 0.0
      %v374 = vmax.f32 %v372, 0.0
      %v375 = vand.u32 2147483647, %v371
      %v376 = vand.u32 2147483647, %v372
      %v377 = vsub.f32 0.0, %v375
      %v378 = vsub.f32 0.0, %v376
      %v379 = vmul.f32 %v377, 1.442695
      %v380 = vpow.pop %v379
      %v381 = vmul.f32 %v378, 1.442695
      %v382 = vpow.pop %v381
      %v383 = vadd.f32 %v380, 1.0
      %v384 = vadd.f32 %v382, 1.0
      %v385 = vlog2.pop %v383
      %v386 = vmul.f32 %v385, 0.6931472
      %v387 = vlog2.pop %v384
      %v388 = vmul.f32 %v387, 0.6931472
      %v389 = vadd.f32 %v373, %v386
      %v390 = vadd.f32 %v374, %v388
      %vm391 = vcmp.ne.s32.totalorder %v327, %v321
      %vm392 = vcmp.ne.s32.totalorder %v328, %v321
      %vm393 = vmand %vm318, %vm391
      %vm394 = vmand %vm319, %vm392
      %v395 = vsel %vm393, %v389, 0.0
      %v396 = vsel %vm394, %v390, 0.0
      %v397 = vld [vmem:[%s4] sm:$0x1]
      %v399 = vperm.slane %v397, 0
      %v401 = vmul.f32 %v395, %v399
      %v402 = vmul.f32 %v396, %v399
      %v403 = vsel %vm338, %v401, 0.0
      %404 = vadd.xlane.f32.xlu0 %v403
      %v405 = vpop.xlane.xlu0 %404
      %v406 = vsel %vm338, %v402, 0.0
      %407 = vadd.xlane.f32.xlu0 %v406
      %v408 = vpop.xlane.xlu0 %407
      %vm409 = vcmask 7168
      %410 = vst.msk [vmem:[%s248] sm:$0xff] %vm409, %v405
      %411 = vst.msk [vmem:[%s248 + $0x8] sm:$0xff] %vm409, %v408
      %s412 = smul.u32 2, %s16
      %p413 = scmp.lt.s32.totalorder %s412, 5
      %s414 = scalar_select %p413, %s412, 5
      %s415 = smul.addr %s414, 8
      %s416 = scalar_lea.vmem %s5, %s415
      // Predicated region
      $region41: #{tpu_custom_call.1} parent=39 // pred_check
        %p417 = pneg %p149
      $region42: #{tpu_custom_call.1} parent=39 // pred_check_branch
        %419 = sbr.rel (%p417) target = $region44
      $region43: #{tpu_custom_call.1} parent=39 // pred_region
        %s420 = smul.u32 2, %s16
      $region44: #{tpu_custom_call.1} parent=39 // pred_fallthru
        _
    $region40: #{tpu_custom_call.1} parent=5 // pred_fallthru
      _
    %p421 = scmp.le.s32.totalorder 2, %s11
    // Predicated region
    $region45: #{tpu_custom_call.1} parent=5 // pred_check
      %p422 = pneg %p421
    $region46: #{tpu_custom_call.1} parent=5 // pred_check_branch
      %424 = sbr.rel (%p422) target = $region48
    $region47: #{tpu_custom_call.1} parent=5 // pred_region
      %s425 = ssub.s32 %s11, 2
      // Predicated region
      $region49: #{tpu_custom_call.1} parent=47 // pred_check
        %p426 = pneg %p155
      $region50: #{tpu_custom_call.1} parent=47 // pred_check_branch
        %428 = sbr.rel (%p426) target = $region52
      $region51: #{tpu_custom_call.1} parent=47 // pred_region
        %s429 = smul.u32 2, %s17
        %p430 = scmp.lt.s32.totalorder %s429, 5
        %s431 = scalar_select %p430, %s429, 5
        %s432 = smul.addr %s431, 8
        %s433 = scalar_lea.vmem %s5, %s432
      $region52: #{tpu_custom_call.1} parent=47 // pred_fallthru
        _
    $region48: #{tpu_custom_call.1} parent=5 // pred_fallthru
      _
  $region6: #{tpu_custom_call.1} parent=0 // loop_footer
    %s15 = sadd.s32 1, %s11
  $region7: #{tpu_custom_call.1} parent=0 // loop_footer_branch
    %10 = sbr.rel target = $region3
  $region8: #{tpu_custom_call.1} parent=0 // loop_exit
    _

</llo_original>
